<compile_context>
chip_gen: v6e
topology: v6e:2x2x1
jax: 0.10.0
libtpu: 0.0.40
codegen_flags: <defaults>
</compile_context>

<pallas_src>
import functools

import jax
import jax.numpy as jnp
from jax.experimental import pallas as pl
from jax.experimental.pallas import tpu as pltpu


def _round_up(x, m):
    return ((x + m - 1) // m) * m


def _pad2d(a, rows, cols):
    return jnp.pad(a, ((0, rows - a.shape[0]), (0, cols - a.shape[1])))


def _make_fused_mlp_kernel(num_layers):
    """Kernel over refs: (x, w0, b0, w1, b1, ..., w_{L-1}, b_{L-1}, out)."""

    def kernel(*refs):
        x_ref = refs[0]
        o_ref = refs[-1]
        h = x_ref[...]
        for i in range(num_layers):
            w_ref = refs[1 + 2 * i]
            b_ref = refs[2 + 2 * i]
            # MXU matmul with f32 accumulation; bias broadcast-add on the VPU.
            h = jnp.dot(h, w_ref[...], preferred_element_type=jnp.float32) + b_ref[...]
        o_ref[...] = h

    return kernel


@functools.partial(jax.jit, static_argnames=("out_size",))
def fused_mlp_forward(x, params, out_size):
    """x: [B, In]; params: list of (w [in,out], b [1,out]); returns [B, out_size]."""
    B, In = x.shape
    dims = [In] + [w.shape[1] for w, _ in params]

    # Lane-dense padding: every feature dim -> multiple of 128; batch -> mult of 8.
    pdims = [_round_up(d, 128) for d in dims]
    pB = _round_up(B, 8)

    x_p = _pad2d(x, pB, pdims[0])
    flat_inputs = [x_p]
    in_specs = [pl.BlockSpec((pB, pdims[0]), lambda i: (0, 0))]
    for li, (w, b) in enumerate(params):
        w_p = _pad2d(w, pdims[li], pdims[li + 1])
        b_p = _pad2d(b, 1, pdims[li + 1])
        flat_inputs += [w_p, b_p]
        in_specs += [
            pl.BlockSpec((pdims[li], pdims[li + 1]), lambda i: (0, 0)),
            pl.BlockSpec((1, pdims[li + 1]), lambda i: (0, 0)),
        ]

    num_layers = len(params)
    flops = 2 * B * sum(dims[i] * dims[i + 1] for i in range(num_layers))
    bytes_accessed = 4 * (
        B * In
        + sum(w.size + b.size for w, b in params)
        + B * dims[-1]
    )

    out_padded = pl.pallas_call(
        _make_fused_mlp_kernel(num_layers),
        out_shape=jax.ShapeDtypeStruct((pB, pdims[-1]), jnp.float32),
        grid=(1,),
        in_specs=in_specs,
        out_specs=pl.BlockSpec((pB, pdims[-1]), lambda i: (0, 0)),
        compiler_params=pltpu.CompilerParams(
            dimension_semantics=("arbitrary",)
        ),
        cost_estimate=pl.CostEstimate(
            flops=flops, transcendentals=0, bytes_accessed=bytes_accessed
        ),
    )(*flat_inputs)

    # Strip padding (padded batch rows / feature cols carry garbage, by design).
    return out_padded[:B, :out_size]


def init_params(key, input_size, hidden_sizes, output_size):
    """Deterministic init mirroring nn.Linear shapes (stored as [in, out])."""
    sizes = [input_size] + list(hidden_sizes) + [output_size]
    params = []
    for i in range(len(sizes) - 1):
        fan_in, fan_out = sizes[i], sizes[i + 1]
        key, kw, kb = jax.random.split(key, 3)
        bound = 1.0 / jnp.sqrt(fan_in)
        w = jax.random.uniform(kw, (fan_in, fan_out), jnp.float32, -bound, bound)
        b = jax.random.uniform(kb, (1, fan_out), jnp.float32, -bound, bound)
        params.append((w, b))
    return params


def neural_network_forward(x, params, output_size):
    # Matches PyTorch module: hidden Linear layers (no activation) + regressor,
    # all fused into a single Pallas kernel.
    return fused_mlp_forward(x, params, output_size)


if __name__ == "__main__":
    key = jax.random.PRNGKey(0)
    batch = 8
    input_size = 32
    hidden_sizes = [64, 48]
    output_size = 16

    key, kx = jax.random.split(key)
    x = jax.random.normal(kx, (batch, input_size), dtype=jnp.float32)

    params = init_params(key, input_size, hidden_sizes, output_size)

    out = neural_network_forward(x, params, output_size)
    out = jax.block_until_ready(out)

    # Reference check with plain JAX.
    ref = x
    for w, b in params:
        ref = ref @ w + b
    assert out.shape == (batch, output_size)
    assert jnp.allclose(out, ref, atol=1e-4, rtol=1e-4)

    print("KERNEL_OK")
</pallas_src>

<mosaic_0001>
module attributes {stable_mosaic.version = 11 : i64} {
  func.func @kernel(%arg0: i32, %arg1: memref<8x128xf32, #tpu.memory_space<vmem>>, %arg2: memref<128x128xf32, #tpu.memory_space<vmem>>, %arg3: memref<1x128xf32, #tpu.memory_space<vmem>>, %arg4: memref<128x128xf32, #tpu.memory_space<vmem>>, %arg5: memref<1x128xf32, #tpu.memory_space<vmem>>, %arg6: memref<128x128xf32, #tpu.memory_space<vmem>>, %arg7: memref<1x128xf32, #tpu.memory_space<vmem>>, %arg8: memref<8x128xf32, #tpu.memory_space<vmem>>) attributes {dimension_semantics = [#tpu.dimension_semantics<arbitrary>], iteration_bounds = array<i64: 1>, scalar_prefetch = 0 : i64, scratch_operands = 0 : i64, tpu.core_type = #tpu.core_type<tc>, window_params = [{pipeline_mode = #tpu.pipeline_mode<synchronous>, transform_indices = @transform_0, window_bounds = array<i64: 8, 128>}, {pipeline_mode = #tpu.pipeline_mode<synchronous>, transform_indices = @transform_1, window_bounds = array<i64: 128, 128>}, {pipeline_mode = #tpu.pipeline_mode<synchronous>, transform_indices = @transform_2, window_bounds = array<i64: 1, 128>}, {pipeline_mode = #tpu.pipeline_mode<synchronous>, transform_indices = @transform_3, window_bounds = array<i64: 128, 128>}, {pipeline_mode = #tpu.pipeline_mode<synchronous>, transform_indices = @transform_4, window_bounds = array<i64: 1, 128>}, {pipeline_mode = #tpu.pipeline_mode<synchronous>, transform_indices = @transform_5, window_bounds = array<i64: 128, 128>}, {pipeline_mode = #tpu.pipeline_mode<synchronous>, transform_indices = @transform_6, window_bounds = array<i64: 1, 128>}, {pipeline_mode = #tpu.pipeline_mode<synchronous>, transform_indices = @transform_7, window_bounds = array<i64: 8, 128>}]} {
    %c0 = arith.constant 0 : index
    %c0_0 = arith.constant 0 : index
    %0 = vector.load %arg1[%c0, %c0_0] : memref<8x128xf32, #tpu.memory_space<vmem>>, vector<8x128xf32>
    %c0_1 = arith.constant 0 : index
    %c0_2 = arith.constant 0 : index
    %1 = vector.load %arg2[%c0_1, %c0_2] : memref<128x128xf32, #tpu.memory_space<vmem>>, vector<128x128xf32>
    %cst = arith.constant dense<0.000000e+00> : vector<8x128xf32>
    %2 = tpu.matmul %0, %1, %cst {dimension_numbers = #tpu.dot_dimension_numbers<[1], [0], [0], [1], [0, 0, 1, 1], [], []>} : vector<8x128xf32>, vector<128x128xf32>, vector<8x128xf32> -> vector<8x128xf32>
    %c0_3 = arith.constant 0 : index
    %c0_4 = arith.constant 0 : index
    %3 = vector.load %arg3[%c0_3, %c0_4] : memref<1x128xf32, #tpu.memory_space<vmem>>, vector<1x128xf32>
    %4 = vector.broadcast %3 : vector<1x128xf32> to vector<8x128xf32>
    %5 = arith.addf %2, %4 : vector<8x128xf32>
    %c0_5 = arith.constant 0 : index
    %c0_6 = arith.constant 0 : index
    %6 = vector.load %arg4[%c0_5, %c0_6] : memref<128x128xf32, #tpu.memory_space<vmem>>, vector<128x128xf32>
    %cst_7 = arith.constant dense<0.000000e+00> : vector<8x128xf32>
    %7 = tpu.matmul %5, %6, %cst_7 {dimension_numbers = #tpu.dot_dimension_numbers<[1], [0], [0], [1], [0, 0, 1, 1], [], []>} : vector<8x128xf32>, vector<128x128xf32>, vector<8x128xf32> -> vector<8x128xf32>
    %c0_8 = arith.constant 0 : index
    %c0_9 = arith.constant 0 : index
    %8 = vector.load %arg5[%c0_8, %c0_9] : memref<1x128xf32, #tpu.memory_space<vmem>>, vector<1x128xf32>
    %9 = vector.broadcast %8 : vector<1x128xf32> to vector<8x128xf32>
    %10 = arith.addf %7, %9 : vector<8x128xf32>
    %c0_10 = arith.constant 0 : index
    %c0_11 = arith.constant 0 : index
    %11 = vector.load %arg6[%c0_10, %c0_11] : memref<128x128xf32, #tpu.memory_space<vmem>>, vector<128x128xf32>
    %cst_12 = arith.constant dense<0.000000e+00> : vector<8x128xf32>
    %12 = tpu.matmul %10, %11, %cst_12 {dimension_numbers = #tpu.dot_dimension_numbers<[1], [0], [0], [1], [0, 0, 1, 1], [], []>} : vector<8x128xf32>, vector<128x128xf32>, vector<8x128xf32> -> vector<8x128xf32>
    %c0_13 = arith.constant 0 : index
    %c0_14 = arith.constant 0 : index
    %13 = vector.load %arg7[%c0_13, %c0_14] : memref<1x128xf32, #tpu.memory_space<vmem>>, vector<1x128xf32>
    %14 = vector.broadcast %13 : vector<1x128xf32> to vector<8x128xf32>
    %15 = arith.addf %12, %14 : vector<8x128xf32>
    %c0_15 = arith.constant 0 : index
    %c0_16 = arith.constant 0 : index
    %16 = vector.load %arg8[%c0_15, %c0_16] : memref<8x128xf32, #tpu.memory_space<vmem>>, vector<8x128xf32>
    tpu.vector_store %arg8[%c0_15, %c0_16], %15 {strides = array<i32>} : memref<8x128xf32, #tpu.memory_space<vmem>>, vector<8x128xf32>,
    return
  }
  func.func @transform_0(%arg0: i32) -> (i32, i32) {
    %c0_i32 = arith.constant 0 : i32
    %c0_i32_0 = arith.constant 0 : i32
    %c0_i32_1 = arith.constant 0 : i32
    return %c0_i32, %c0_i32_0 : i32, i32
  }
  func.func @transform_1(%arg0: i32) -> (i32, i32) {
    %c0_i32 = arith.constant 0 : i32
    %c0_i32_0 = arith.constant 0 : i32
    %c0_i32_1 = arith.constant 0 : i32
    return %c0_i32, %c0_i32_0 : i32, i32
  }
  func.func @transform_2(%arg0: i32) -> (i32, i32) {
    %c0_i32 = arith.constant 0 : i32
    %c0_i32_0 = arith.constant 0 : i32
    %c0_i32_1 = arith.constant 0 : i32
    return %c0_i32, %c0_i32_0 : i32, i32
  }
  func.func @transform_3(%arg0: i32) -> (i32, i32) {
    %c0_i32 = arith.constant 0 : i32
    %c0_i32_0 = arith.constant 0 : i32
    %c0_i32_1 = arith.constant 0 : i32
    return %c0_i32, %c0_i32_0 : i32, i32
  }
  func.func @transform_4(%arg0: i32) -> (i32, i32) {
    %c0_i32 = arith.constant 0 : i32
    %c0_i32_0 = arith.constant 0 : i32
    %c0_i32_1 = arith.constant 0 : i32
    return %c0_i32, %c0_i32_0 : i32, i32
  }
  func.func @transform_5(%arg0: i32) -> (i32, i32) {
    %c0_i32 = arith.constant 0 : i32
    %c0_i32_0 = arith.constant 0 : i32
    %c0_i32_1 = arith.constant 0 : i32
    return %c0_i32, %c0_i32_0 : i32, i32
  }
  func.func @transform_6(%arg0: i32) -> (i32, i32) {
    %c0_i32 = arith.constant 0 : i32
    %c0_i32_0 = arith.constant 0 : i32
    %c0_i32_1 = arith.constant 0 : i32
    return %c0_i32, %c0_i32_0 : i32, i32
  }
  func.func @transform_7(%arg0: i32) -> (i32, i32) {
    %c0_i32 = arith.constant 0 : i32
    %c0_i32_0 = arith.constant 0 : i32
    %c0_i32_1 = arith.constant 0 : i32
    return %c0_i32, %c0_i32_0 : i32, i32
  }
}

</mosaic_0001>

<llo_original>
// kernel: fused_mlp_forward.1
$region0: #{fused_mlp_forward.1}
  #allocation0 [shape = 'u32[]', space=smem, size = 0x4, offset = 0x4, fixed_abs, tag = 'smem constant byte address 0x4 - core index']
  #allocation1 [shape = 'u32[144,128]{1,0:T(1,128)}', space=vmem, size = 0x12000, scoped, tag = 'internal scratch']
  %s0 = inlined_call_operand.vmem [shape: f32[8,128], index: 0, kind: input, shape index: {}]
  %s1 = inlined_call_operand.vmem [shape: f32[128,128], index: 1, kind: input, shape index: {}]
  %s2 = inlined_call_operand.vmem [shape: f32[1,128], index: 2, kind: input, shape index: {}]
  %s3 = inlined_call_operand.vmem [shape: f32[128,128], index: 3, kind: input, shape index: {}]
  %s4 = inlined_call_operand.vmem [shape: f32[1,128], index: 4, kind: input, shape index: {}]
  %s5 = inlined_call_operand.vmem [shape: f32[128,128], index: 5, kind: input, shape index: {}]
  %s6 = inlined_call_operand.vmem [shape: f32[1,128], index: 6, kind: input, shape index: {}]
  %s7 = inlined_call_operand.hbm [shape: f32[8,128], index: 7, kind: output, shape index: {}]
  %s8 = sld [smem:[#allocation0]]
  $region38: #{fused_mlp_forward.1} parent=0
    _
  %s10 = ssub.s32 1, %s8
  %s11 = scalar_select 0, %s10, %s8
  $region1: #{fused_mlp_forward.1} parent=0
    #allocation2 [shape = 'u8[4096]{0}', space=vmem, size = 0x1000, scoped, tag = 'output window, operand 0, single buffered']
    #allocation3 [shape = 's32[1]{0}', space=sflag, size = 0x4, scoped, tag = 'scoped memory for fused_mlp_forward.1']
    %12 = vsyncpa [#allocation3], 0
    // Predicated region
    $region2: #{fused_mlp_forward.1} parent=1 // pred_check
      _
    $region3: #{fused_mlp_forward.1} parent=1 // pred_check_branch
      %14 = sbr.rel (0) target = $region5
    $region4: #{fused_mlp_forward.1} parent=1 // pred_region
      _
    $region5: #{fused_mlp_forward.1} parent=1 // pred_fallthru
      _
    // Predicated region
    $region6: #{fused_mlp_forward.1} parent=1 // pred_check
      _
    $region7: #{fused_mlp_forward.1} parent=1 // pred_check_branch
      %16 = sbr.rel (0) target = $region9
    $region8: #{fused_mlp_forward.1} parent=1 // pred_region
      _
    $region9: #{fused_mlp_forward.1} parent=1 // pred_fallthru
      _
    // Predicated region
    $region10: #{fused_mlp_forward.1} parent=1 // pred_check
      _
    $region11: #{fused_mlp_forward.1} parent=1 // pred_check_branch
      %18 = sbr.rel (0) target = $region13
    $region12: #{fused_mlp_forward.1} parent=1 // pred_region
      _
    $region13: #{fused_mlp_forward.1} parent=1 // pred_fallthru
      _
    // Predicated region
    $region14: #{fused_mlp_forward.1} parent=1 // pred_check
      _
    $region15: #{fused_mlp_forward.1} parent=1 // pred_check_branch
      %20 = sbr.rel (0) target = $region17
    $region16: #{fused_mlp_forward.1} parent=1 // pred_region
      _
    $region17: #{fused_mlp_forward.1} parent=1 // pred_fallthru
      _
    // Predicated region
    $region18: #{fused_mlp_forward.1} parent=1 // pred_check
      _
    $region19: #{fused_mlp_forward.1} parent=1 // pred_check_branch
      %22 = sbr.rel (0) target = $region21
    $region20: #{fused_mlp_forward.1} parent=1 // pred_region
      _
    $region21: #{fused_mlp_forward.1} parent=1 // pred_fallthru
      _
    // Predicated region
    $region22: #{fused_mlp_forward.1} parent=1 // pred_check
      _
    $region23: #{fused_mlp_forward.1} parent=1 // pred_check_branch
      %24 = sbr.rel (0) target = $region25
    $region24: #{fused_mlp_forward.1} parent=1 // pred_region
      _
    $region25: #{fused_mlp_forward.1} parent=1 // pred_fallthru
      _
    // Predicated region
    $region26: #{fused_mlp_forward.1} parent=1 // pred_check
      _
    $region27: #{fused_mlp_forward.1} parent=1 // pred_check_branch
      %26 = sbr.rel (0) target = $region29
    $region28: #{fused_mlp_forward.1} parent=1 // pred_region
      _
    $region29: #{fused_mlp_forward.1} parent=1 // pred_fallthru
      _
    %v27 = vld [vmem:[%s0] sm:$0xff]
    %v28 = vld [vmem:[%s1] sm:$0xff]
    %v29 = vld [vmem:[%s1 + $0x8] sm:$0xff]
    %v30 = vld [vmem:[%s1 + $0x10] sm:$0xff]
    %v31 = vld [vmem:[%s1 + $0x18] sm:$0xff]
    %v32 = vld [vmem:[%s1 + $0x20] sm:$0xff]
    %v33 = vld [vmem:[%s1 + $0x28] sm:$0xff]
    %v34 = vld [vmem:[%s1 + $0x30] sm:$0xff]
    %v35 = vld [vmem:[%s1 + $0x38] sm:$0xff]
    %v36 = vld [vmem:[%s1 + $0x40] sm:$0xff]
    %v37 = vld [vmem:[%s1 + $0x48] sm:$0xff]
    %v38 = vld [vmem:[%s1 + $0x50] sm:$0xff]
    %v39 = vld [vmem:[%s1 + $0x58] sm:$0xff]
    %v40 = vld [vmem:[%s1 + $0x60] sm:$0xff]
    %v41 = vld [vmem:[%s1 + $0x68] sm:$0xff]
    %v42 = vld [vmem:[%s1 + $0x70] sm:$0xff]
    %v43 = vld [vmem:[%s1 + $0x78] sm:$0xff]
    %v44 = vld [vmem:[%s2] sm:$0x1]
    %v46 = vlaneseq
    %v47 = vshrl.u32 %v46, 7
    %v48 = vsub.s32 0, %v47
    %v49 = vrot.slane %v44, %v48
    %51 = vmatprep.subr.mxu0 0.0
    %52 = vmatpush1.msra.mxu0 %v43
    %53 = vmatprep.subr.mxu0 0.0
    %54 = vmatpush1.msra.mxu0 %v42
    %55 = vmatprep.subr.mxu0 0.0
    %56 = vmatpush1.msra.mxu0 %v41
    %57 = vmatprep.subr.mxu0 0.0
    %58 = vmatpush1.msra.mxu0 %v40
    %59 = vmatprep.subr.mxu0 0.0
    %60 = vmatpush1.msra.mxu0 %v39
    %61 = vmatprep.subr.mxu0 0.0
    %62 = vmatpush1.msra.mxu0 %v38
    %63 = vmatprep.subr.mxu0 0.0
    %64 = vmatpush1.msra.mxu0 %v37
    %65 = vmatprep.subr.mxu0 0.0
    %66 = vmatpush1.msra.mxu0 %v36
    %67 = vmatprep.subr.mxu0 0.0
    %68 = vmatpush1.msra.mxu0 %v35
    %69 = vmatprep.subr.mxu0 0.0
    %70 = vmatpush1.msra.mxu0 %v34
    %71 = vmatprep.subr.mxu0 0.0
    %72 = vmatpush1.msra.mxu0 %v33
    %73 = vmatprep.subr.mxu0 0.0
    %74 = vmatpush1.msra.mxu0 %v32
    %75 = vmatprep.subr.mxu0 0.0
    %76 = vmatpush1.msra.mxu0 %v31
    %77 = vmatprep.subr.mxu0 0.0
    %78 = vmatpush1.msra.mxu0 %v30
    %79 = vmatprep.subr.mxu0 0.0
    %80 = vmatpush1.msra.mxu0 %v29
    %81 = vmatprep.subr.mxu0 0.0
    %82 = vmatpush1.msra.mxu0 %v28
    %83 = vmatprep.subr.mxu0 0.0
    %84 = vmatpush2.msra.mxu0 0.0
    %85 = vmatprep.subr.mxu0 0.0
    %86 = vmatpush2.msra.mxu0 0.0
    %87 = vmatprep.subr.mxu0 0.0
    %88 = vmatpush2.msra.mxu0 0.0
    %89 = vmatprep.subr.mxu0 0.0
    %90 = vmatpush2.msra.mxu0 0.0
    %91 = vmatprep.subr.mxu0 0.0
    %92 = vmatpush2.msra.mxu0 0.0
    %93 = vmatprep.subr.mxu0 0.0
    %94 = vmatpush2.msra.mxu0 0.0
    %95 = vmatprep.subr.mxu0 0.0
    %96 = vmatpush2.msra.mxu0 0.0
    %97 = vmatprep.subr.mxu0 0.0
    %98 = vmatpush2.msra.mxu0 0.0
    %99 = vmatprep.subr.mxu0 0.0
    %100 = vmatpush2.msra.mxu0 0.0
    %101 = vmatprep.subr.mxu0 0.0
    %102 = vmatpush2.msra.mxu0 0.0
    %103 = vmatprep.subr.mxu0 0.0
    %104 = vmatpush2.msra.mxu0 0.0
    %105 = vmatprep.subr.mxu0 0.0
    %106 = vmatpush2.msra.mxu0 0.0
    %107 = vmatprep.subr.mxu0 0.0
    %108 = vmatpush2.msra.mxu0 0.0
    %109 = vmatprep.subr.mxu0 0.0
    %110 = vmatpush2.msra.mxu0 0.0
    %111 = vmatprep.subr.mxu0 0.0
    %112 = vmatpush2.msra.mxu0 0.0
    %113 = vmatprep.subr.mxu0 0.0
    %114 = vmatpush2.msra.mxu0 0.0
    %115 = vmatprep.mubr.f32.mxu0 0.0
    %116 = vmatmul.mubr.f32.gmra.mxu0 %v27
    %v117 = vpop.f32.mrf.mxu0
    %v118 = vadd.f32 %v49, %v117
    %v119 = vpop.f32.mrf.mxu0
    %120 = vdwg.mxu0
    %v121 = vld [vmem:[%s3] sm:$0xff]
    %v122 = vld [vmem:[%s3 + $0x8] sm:$0xff]
    %v123 = vld [vmem:[%s3 + $0x10] sm:$0xff]
    %v124 = vld [vmem:[%s3 + $0x18] sm:$0xff]
    %v125 = vld [vmem:[%s3 + $0x20] sm:$0xff]
    %v126 = vld [vmem:[%s3 + $0x28] sm:$0xff]
    %v127 = vld [vmem:[%s3 + $0x30] sm:$0xff]
    %v128 = vld [vmem:[%s3 + $0x38] sm:$0xff]
    %v129 = vld [vmem:[%s3 + $0x40] sm:$0xff]
    %v130 = vld [vmem:[%s3 + $0x48] sm:$0xff]
    %v131 = vld [vmem:[%s3 + $0x50] sm:$0xff]
    %v132 = vld [vmem:[%s3 + $0x58] sm:$0xff]
    %v133 = vld [vmem:[%s3 + $0x60] sm:$0xff]
    %v134 = vld [vmem:[%s3 + $0x68] sm:$0xff]
    %v135 = vld [vmem:[%s3 + $0x70] sm:$0xff]
    %v136 = vld [vmem:[%s3 + $0x78] sm:$0xff]
    %v137 = vld [vmem:[%s4] sm:$0x1]
    %v139 = vlaneseq
    %v140 = vshrl.u32 %v139, 7
    %v141 = vsub.s32 0, %v140
    %v142 = vrot.slane %v137, %v141
    %144 = vmatprep.subr.mxu0 0.0
    %145 = vmatpush1.msra.mxu0 %v136
    %146 = vmatprep.subr.mxu0 0.0
    %147 = vmatpush1.msra.mxu0 %v135
    %148 = vmatprep.subr.mxu0 0.0
    %149 = vmatpush1.msra.mxu0 %v134
    %150 = vmatprep.subr.mxu0 0.0
    %151 = vmatpush1.msra.mxu0 %v133
    %152 = vmatprep.subr.mxu0 0.0
    %153 = vmatpush1.msra.mxu0 %v132
    %154 = vmatprep.subr.mxu0 0.0
    %155 = vmatpush1.msra.mxu0 %v131
    %156 = vmatprep.subr.mxu0 0.0
    %157 = vmatpush1.msra.mxu0 %v130
    %158 = vmatprep.subr.mxu0 0.0
    %159 = vmatpush1.msra.mxu0 %v129
    %160 = vmatprep.subr.mxu0 0.0
    %161 = vmatpush1.msra.mxu0 %v128
    %162 = vmatprep.subr.mxu0 0.0
    %163 = vmatpush1.msra.mxu0 %v127
    %164 = vmatprep.subr.mxu0 0.0
    %165 = vmatpush1.msra.mxu0 %v126
    %166 = vmatprep.subr.mxu0 0.0
    %167 = vmatpush1.msra.mxu0 %v125
    %168 = vmatprep.subr.mxu0 0.0
    %169 = vmatpush1.msra.mxu0 %v124
    %170 = vmatprep.subr.mxu0 0.0
    %171 = vmatpush1.msra.mxu0 %v123
    %172 = vmatprep.subr.mxu0 0.0
    %173 = vmatpush1.msra.mxu0 %v122
    %174 = vmatprep.subr.mxu0 0.0
    %175 = vmatpush1.msra.mxu0 %v121
    %176 = vmatprep.subr.mxu0 0.0
    %177 = vmatpush2.msra.mxu0 0.0
    %178 = vmatprep.subr.mxu0 0.0
    %179 = vmatpush2.msra.mxu0 0.0
    %180 = vmatprep.subr.mxu0 0.0
    %181 = vmatpush2.msra.mxu0 0.0
    %182 = vmatprep.subr.mxu0 0.0
    %183 = vmatpush2.msra.mxu0 0.0
    %184 = vmatprep.subr.mxu0 0.0
    %185 = vmatpush2.msra.mxu0 0.0
    %186 = vmatprep.subr.mxu0 0.0
    %187 = vmatpush2.msra.mxu0 0.0
    %188 = vmatprep.subr.mxu0 0.0
    %189 = vmatpush2.msra.mxu0 0.0
    %190 = vmatprep.subr.mxu0 0.0
    %191 = vmatpush2.msra.mxu0 0.0
    %192 = vmatprep.subr.mxu0 0.0
    %193 = vmatpush2.msra.mxu0 0.0
    %194 = vmatprep.subr.mxu0 0.0
    %195 = vmatpush2.msra.mxu0 0.0
    %196 = vmatprep.subr.mxu0 0.0
    %197 = vmatpush2.msra.mxu0 0.0
    %198 = vmatprep.subr.mxu0 0.0
    %199 = vmatpush2.msra.mxu0 0.0
    %200 = vmatprep.subr.mxu0 0.0
    %201 = vmatpush2.msra.mxu0 0.0
    %202 = vmatprep.subr.mxu0 0.0
    %203 = vmatpush2.msra.mxu0 0.0
    %204 = vmatprep.subr.mxu0 0.0
    %205 = vmatpush2.msra.mxu0 0.0
    %206 = vmatprep.subr.mxu0 0.0
    %207 = vmatpush2.msra.mxu0 0.0
    %208 = vmatprep.mubr.f32.mxu0 0.0
    %209 = vmatmul.mubr.f32.gmra.mxu0 %v118
    %v210 = vpop.f32.mrf.mxu0
    %v211 = vadd.f32 %v142, %v210
    %v212 = vpop.f32.mrf.mxu0
    %213 = vdwg.mxu0
    %v214 = vld [vmem:[%s5] sm:$0xff]
    %v215 = vld [vmem:[%s5 + $0x8] sm:$0xff]
    %v216 = vld [vmem:[%s5 + $0x10] sm:$0xff]
    %v217 = vld [vmem:[%s5 + $0x18] sm:$0xff]
    %v218 = vld [vmem:[%s5 + $0x20] sm:$0xff]
    %v219 = vld [vmem:[%s5 + $0x28] sm:$0xff]
    %v220 = vld [vmem:[%s5 + $0x30] sm:$0xff]
    %v221 = vld [vmem:[%s5 + $0x38] sm:$0xff]
    %v222 = vld [vmem:[%s5 + $0x40] sm:$0xff]
    %v223 = vld [vmem:[%s5 + $0x48] sm:$0xff]
    %v224 = vld [vmem:[%s5 + $0x50] sm:$0xff]
    %v225 = vld [vmem:[%s5 + $0x58] sm:$0xff]
    %v226 = vld [vmem:[%s5 + $0x60] sm:$0xff]
    %v227 = vld [vmem:[%s5 + $0x68] sm:$0xff]
    %v228 = vld [vmem:[%s5 + $0x70] sm:$0xff]
    %v229 = vld [vmem:[%s5 + $0x78] sm:$0xff]
    %v230 = vld [vmem:[%s6] sm:$0x1]
    %v232 = vlaneseq
    %v233 = vshrl.u32 %v232, 7
    %v234 = vsub.s32 0, %v233
    %v235 = vrot.slane %v230, %v234
    %237 = vmatprep.subr.mxu0 0.0
    %238 = vmatpush1.msra.mxu0 %v229
    %239 = vmatprep.subr.mxu0 0.0
    %240 = vmatpush1.msra.mxu0 %v228
    %241 = vmatprep.subr.mxu0 0.0
    %242 = vmatpush1.msra.mxu0 %v227
    %243 = vmatprep.subr.mxu0 0.0
    %244 = vmatpush1.msra.mxu0 %v226
    %245 = vmatprep.subr.mxu0 0.0
    %246 = vmatpush1.msra.mxu0 %v225
    %247 = vmatprep.subr.mxu0 0.0
    %248 = vmatpush1.msra.mxu0 %v224
    %249 = vmatprep.subr.mxu0 0.0
    %250 = vmatpush1.msra.mxu0 %v223
    %251 = vmatprep.subr.mxu0 0.0
    %252 = vmatpush1.msra.mxu0 %v222
    %253 = vmatprep.subr.mxu0 0.0
    %254 = vmatpush1.msra.mxu0 %v221
    %255 = vmatprep.subr.mxu0 0.0
    %256 = vmatpush1.msra.mxu0 %v220
    %257 = vmatprep.subr.mxu0 0.0
    %258 = vmatpush1.msra.mxu0 %v219
    %259 = vmatprep.subr.mxu0 0.0
    %260 = vmatpush1.msra.mxu0 %v218
    %261 = vmatprep.subr.mxu0 0.0
    %262 = vmatpush1.msra.mxu0 %v217
    %263 = vmatprep.subr.mxu0 0.0
    %264 = vmatpush1.msra.mxu0 %v216
    %265 = vmatprep.subr.mxu0 0.0
    %266 = vmatpush1.msra.mxu0 %v215
    %267 = vmatprep.subr.mxu0 0.0
    %268 = vmatpush1.msra.mxu0 %v214
    %269 = vmatprep.subr.mxu0 0.0
    %270 = vmatpush2.msra.mxu0 0.0
    %271 = vmatprep.subr.mxu0 0.0
    %272 = vmatpush2.msra.mxu0 0.0
    %273 = vmatprep.subr.mxu0 0.0
    %274 = vmatpush2.msra.mxu0 0.0
    %275 = vmatprep.subr.mxu0 0.0
    %276 = vmatpush2.msra.mxu0 0.0
    %277 = vmatprep.subr.mxu0 0.0
    %278 = vmatpush2.msra.mxu0 0.0
    %279 = vmatprep.subr.mxu0 0.0
    %280 = vmatpush2.msra.mxu0 0.0
    %281 = vmatprep.subr.mxu0 0.0
    %282 = vmatpush2.msra.mxu0 0.0
    %283 = vmatprep.subr.mxu0 0.0
    %284 = vmatpush2.msra.mxu0 0.0
    %285 = vmatprep.subr.mxu0 0.0
    %286 = vmatpush2.msra.mxu0 0.0
    %287 = vmatprep.subr.mxu0 0.0
    %288 = vmatpush2.msra.mxu0 0.0
    %289 = vmatprep.subr.mxu0 0.0
    %290 = vmatpush2.msra.mxu0 0.0
    %291 = vmatprep.subr.mxu0 0.0
    %292 = vmatpush2.msra.mxu0 0.0
    %293 = vmatprep.subr.mxu0 0.0
    %294 = vmatpush2.msra.mxu0 0.0
    %295 = vmatprep.subr.mxu0 0.0
    %296 = vmatpush2.msra.mxu0 0.0
    %297 = vmatprep.subr.mxu0 0.0
    %298 = vmatpush2.msra.mxu0 0.0
    %299 = vmatprep.subr.mxu0 0.0
    %300 = vmatpush2.msra.mxu0 0.0
    %301 = vmatprep.mubr.f32.mxu0 0.0
    %302 = vmatmul.mubr.f32.gmra.mxu0 %v211
    %v303 = vpop.f32.mrf.mxu0
    %v304 = vadd.f32 %v235, %v303
    %v305 = vpop.f32.mrf.mxu0
    %306 = vdwg.mxu0
    %307 = vst [vmem:[#allocation2] sm:$0xff] %v304
    // Predicated region
    $region30: #{fused_mlp_forward.1} parent=1 // pred_check
      _
    $region31: #{fused_mlp_forward.1} parent=1 // pred_check_branch
      %309 = sbr.rel (0) target = $region33
    $region32: #{fused_mlp_forward.1} parent=1 // pred_region
      %s311 = ssub.s32 128, 128
      %312 = vsyncadd [#allocation3], %s311
      %s314 = sshll.u32 [#allocation2], 4
      %s315 = int_to_ptr.vmem [resolvable:$true] %s314
      %317 = dma.vmem_to_hbm [thread:$0]  %s315, 128, %s7, [#allocation3]
    $region33: #{fused_mlp_forward.1} parent=1 // pred_fallthru
      _
    // Predicated region
    $region34: #{fused_mlp_forward.1} parent=1 // pred_check
      _
    $region35: #{fused_mlp_forward.1} parent=1 // pred_check_branch
      %319 = sbr.rel (0) target = $region37
    $region36: #{fused_mlp_forward.1} parent=1 // pred_region
      %320 = dma.done [#allocation3], 128
    $region37: #{fused_mlp_forward.1} parent=1 // pred_fallthru
      _
    %321 = vsyncpa [#allocation3], 1

</llo_original>
